<compile_context>
chip_gen: v5e
topology: v5e:2x2
jax: 0.10.0
libtpu: 0.0.40
codegen_flags: <defaults>
</compile_context>

<pallas_src>
import functools

import jax
import jax.numpy as jnp
from jax.experimental import pallas as pl
from jax.experimental.pallas import tpu as pltpu


def mlp_kernel(x_ref, w1_ref, b1_ref, w2_ref, b2_ref, o_ref):
    # x_ref:  (TN, Hp)     f32  -> cast to bf16 in-kernel (hidden under tile DMA)
    # w1_ref: (Hp, Hp)     bf16 (block-diagonal replica of W1)
    # b1_ref: (1, Hp)      f32  (tiled bias)
    # w2_ref: (Hp, OUT_P)  bf16 (block-diagonal W2)
    # b2_ref: (1, OUT_P)   f32
    # o_ref:  (TN, OUT_P)  f32  (compact output, no lane padding)
    x = x_ref[...].astype(jnp.bfloat16)
    h = jnp.dot(x, w1_ref[...], preferred_element_type=jnp.float32)
    h = jnp.maximum(h + b1_ref[...], 0.0)
    # dropout -> identity (eval semantics)
    y = jnp.dot(h.astype(jnp.bfloat16), w2_ref[...],
                preferred_element_type=jnp.float32)
    o_ref[...] = y + b2_ref[...]


def _packing_factor(H, lane_target=256):
    """How many tokens to pack per row of the MXU contraction dim."""
    for target in (lane_target, 128):
        if H <= target and target % H == 0:
            return target // H
    return 1


def pack_params(w1, b1, w2, b2, *, lane_target=256):
    """Build block-diagonal (kron) packed weights ONCE; reuse across forward calls.

    Weights stored as (in, out) -- transposed vs. PyTorch's (out, in).
    """
    H = w1.shape[0]
    OUT = w2.shape[1]
    P = _packing_factor(H, lane_target)
    eye_p = jnp.eye(P, dtype=jnp.float32)
    w1_blk = jnp.kron(eye_p, w1.astype(jnp.float32)).astype(jnp.bfloat16)   # (Hp, Hp)
    b1_blk = jnp.tile(b1.reshape(1, H).astype(jnp.float32), (1, P))          # (1, Hp)
    w2_blk = jnp.kron(eye_p, w2.astype(jnp.float32)).astype(jnp.bfloat16)    # (Hp, OUT_P)
    b2_blk = jnp.tile(b2.reshape(1, OUT).astype(jnp.float32), (1, P))        # (1, OUT_P)
    return w1_blk, b1_blk, w2_blk, b2_blk


@functools.partial(jax.jit, static_argnames=("tile_rows",))
def custom_mlp(x, w1_blk, b1_blk, w2_blk, b2_blk, *, tile_rows=2048):
    """x: (..., H) float32 -> (..., OUT) float32. Packed weights from pack_params."""
    orig_shape = x.shape
    H = orig_shape[-1]
    Hp = w1_blk.shape[0]
    P = Hp // H
    OUT_P = w2_blk.shape[1]
    OUT = OUT_P // P

    x2d = x.reshape(-1, H)
    N = x2d.shape[0]

    # Pack P tokens per row, pad rows to a tile multiple.
    rows = pl.cdiv(N, P)
    # TN: multiple of 16, capped so the grid has >=2 steps when possible (v7x 2 TCs).
    half_rows = -(-rows // 2)
    TN = min(tile_rows, max(16, ((half_rows + 15) // 16) * 16))
    rows_padded = ((rows + TN - 1) // TN) * TN
    n_pad_tokens = rows_padded * P - N

    x_pad = jnp.pad(x2d, ((0, n_pad_tokens), (0, 0)))
    x_packed = x_pad.reshape(rows_padded, Hp)        # stays f32; cast in-kernel

    grid = (rows_padded // TN,)

    # Advisory cost for the XLA scheduler.
    flops = 2 * rows_padded * Hp * (Hp + OUT_P)
    bytes_accessed = (rows_padded * Hp * 4 + rows_padded * OUT_P * 4
                      + w1_blk.size * 2 + w2_blk.size * 2
                      + b1_blk.size * 4 + b2_blk.size * 4)
    cost = pl.CostEstimate(flops=flops, transcendentals=0,
                           bytes_accessed=bytes_accessed)

    # Explicit scoped-VMEM request: double-buffered X/out tiles + resident weights.
    vmem_bytes = (2 * (TN * Hp * 4 + TN * OUT_P * 4)
                  + 2 * (Hp * Hp * 2 + Hp * 4 + Hp * OUT_P * 2 + OUT_P * 4)
                  + (4 << 20))
    vmem_limit = int(min(max(vmem_bytes, 16 << 20), 48 << 20))

    out = pl.pallas_call(
        mlp_kernel,
        out_shape=jax.ShapeDtypeStruct((rows_padded, OUT_P), jnp.float32),
        grid_spec=pltpu.PrefetchScalarGridSpec(
            num_scalar_prefetch=0,
            grid=grid,
            in_specs=[
                pl.BlockSpec((TN, Hp), lambda i: (i, 0)),       # X: tiled over rows
                pl.BlockSpec((Hp, Hp), lambda i: (0, 0)),       # W1: resident
                pl.BlockSpec((1, Hp), lambda i: (0, 0)),        # b1: resident
                pl.BlockSpec((Hp, OUT_P), lambda i: (0, 0)),    # W2: resident
                pl.BlockSpec((1, OUT_P), lambda i: (0, 0)),     # b2: resident
            ],
            out_specs=pl.BlockSpec((TN, OUT_P), lambda i: (i, 0)),
        ),
        compiler_params=pltpu.CompilerParams(
            dimension_semantics=("parallel",),
            vmem_limit_bytes=vmem_limit),
        cost_estimate=cost,
    )(x_packed, w1_blk, b1_blk, w2_blk, b2_blk)

    y = out.reshape(rows_padded * P, OUT)[:N]
    return y.reshape(*orig_shape[:-1], OUT)


def init_params(key, num_hiddens):
    """Deterministic init mimicking nn.Linear's uniform(-1/sqrt(fan_in), 1/sqrt(fan_in))."""
    k1, k2, k3, k4 = jax.random.split(key, 4)
    bound1 = 1.0 / jnp.sqrt(num_hiddens)
    # stored as (in, out) -- transposed vs. PyTorch's (out, in)
    w1 = jax.random.uniform(k1, (num_hiddens, num_hiddens), jnp.float32, -bound1, bound1)
    b1 = jax.random.uniform(k2, (1, num_hiddens), jnp.float32, -bound1, bound1)
    w2 = jax.random.uniform(k3, (num_hiddens, 2), jnp.float32, -bound1, bound1)
    b2 = jax.random.uniform(k4, (1, 2), jnp.float32, -bound1, bound1)
    return w1, b1, w2, b2


if __name__ == "__main__":
    key = jax.random.PRNGKey(0)
    kx, kp = jax.random.split(key)

    num_hiddens = 32
    batch, seq = 2, 8
    x = jax.random.normal(kx, (batch, seq, num_hiddens), dtype=jnp.float32)

    w1, b1, w2, b2 = init_params(kp, num_hiddens)

    # Pack weights once (outside the jitted forward); reuse across calls.
    packed = pack_params(w1, b1, w2, b2)
    packed = jax.tree_util.tree_map(jax.block_until_ready, packed)

    out = custom_mlp(x, *packed)
    out = jax.block_until_ready(out)

    # reference in plain JAX f32 (eval-mode dropout = identity)
    ref = jnp.maximum(x @ w1 + b1[0], 0.0) @ w2 + b2[0]
    assert out.shape == (batch, seq, 2), out.shape
    # bf16 MXU inputs with f32 accumulation -> loosened tolerance
    assert jnp.allclose(out, ref, atol=5e-2, rtol=5e-2), "mismatch vs reference"

    print("KERNEL_OK")
</pallas_src>

<mosaic_0001>
module attributes {stable_mosaic.version = 11 : i64} {
  func.func @mlp_kernel(%arg0: i32, %arg1: memref<16x256xf32, #tpu.memory_space<vmem>>, %arg2: memref<256x256xbf16, #tpu.memory_space<vmem>>, %arg3: memref<1x256xf32, #tpu.memory_space<vmem>>, %arg4: memref<256x16xbf16, #tpu.memory_space<vmem>>, %arg5: memref<1x16xf32, #tpu.memory_space<vmem>>, %arg6: memref<16x16xf32, #tpu.memory_space<vmem>>) attributes {dimension_semantics = [#tpu.dimension_semantics<parallel>], iteration_bounds = array<i64: 1>, scalar_prefetch = 0 : i64, scratch_operands = 0 : i64, tpu.core_type = #tpu.core_type<tc>, window_params = [{transform_indices = @transform_0, window_bounds = array<i64: 16, 256>}, {pipeline_mode = #tpu.pipeline_mode<synchronous>, transform_indices = @transform_1, window_bounds = array<i64: 256, 256>}, {pipeline_mode = #tpu.pipeline_mode<synchronous>, transform_indices = @transform_2, window_bounds = array<i64: 1, 256>}, {pipeline_mode = #tpu.pipeline_mode<synchronous>, transform_indices = @transform_3, window_bounds = array<i64: 256, 16>}, {pipeline_mode = #tpu.pipeline_mode<synchronous>, transform_indices = @transform_4, window_bounds = array<i64: 1, 16>}, {transform_indices = @transform_5, window_bounds = array<i64: 16, 16>}]} {
    %c0 = arith.constant 0 : index
    %c0_0 = arith.constant 0 : index
    %0 = vector.load %arg1[%c0, %c0_0] : memref<16x256xf32, #tpu.memory_space<vmem>>, vector<16x256xf32>
    %1 = arith.truncf %0 : vector<16x256xf32> to vector<16x256xbf16>
    %c0_1 = arith.constant 0 : index
    %c0_2 = arith.constant 0 : index
    %2 = vector.load %arg2[%c0_1, %c0_2] : memref<256x256xbf16, #tpu.memory_space<vmem>>, vector<256x256xbf16>
    %cst = arith.constant dense<0.000000e+00> : vector<16x256xf32>
    %3 = tpu.matmul %1, %2, %cst {dimension_numbers = #tpu.dot_dimension_numbers<[1], [0], [0], [1], [0, 0, 1, 1], [], []>} : vector<16x256xbf16>, vector<256x256xbf16>, vector<16x256xf32> -> vector<16x256xf32>
    %c0_3 = arith.constant 0 : index
    %c0_4 = arith.constant 0 : index
    %4 = vector.load %arg3[%c0_3, %c0_4] : memref<1x256xf32, #tpu.memory_space<vmem>>, vector<1x256xf32>
    %5 = vector.broadcast %4 : vector<1x256xf32> to vector<16x256xf32>
    %6 = arith.addf %3, %5 : vector<16x256xf32>
    %cst_5 = arith.constant 0.000000e+00 : f32
    %7 = vector.broadcast %cst_5 : f32 to vector<16x256xf32>
    %8 = arith.maximumf %6, %7 : vector<16x256xf32>
    %9 = arith.truncf %8 : vector<16x256xf32> to vector<16x256xbf16>
    %c0_6 = arith.constant 0 : index
    %c0_7 = arith.constant 0 : index
    %10 = vector.load %arg4[%c0_6, %c0_7] : memref<256x16xbf16, #tpu.memory_space<vmem>>, vector<256x16xbf16>
    %cst_8 = arith.constant dense<0.000000e+00> : vector<16x16xf32>
    %11 = tpu.matmul %9, %10, %cst_8 {dimension_numbers = #tpu.dot_dimension_numbers<[1], [0], [0], [1], [0, 0, 1, 1], [], []>} : vector<16x256xbf16>, vector<256x16xbf16>, vector<16x16xf32> -> vector<16x16xf32>
    %c0_9 = arith.constant 0 : index
    %c0_10 = arith.constant 0 : index
    %12 = vector.load %arg5[%c0_9, %c0_10] : memref<1x16xf32, #tpu.memory_space<vmem>>, vector<1x16xf32>
    %13 = vector.broadcast %12 : vector<1x16xf32> to vector<16x16xf32>
    %14 = arith.addf %11, %13 : vector<16x16xf32>
    %c0_11 = arith.constant 0 : index
    %c0_12 = arith.constant 0 : index
    %15 = vector.load %arg6[%c0_11, %c0_12] : memref<16x16xf32, #tpu.memory_space<vmem>>, vector<16x16xf32>
    tpu.vector_store %arg6[%c0_11, %c0_12], %14 {strides = array<i32>} : memref<16x16xf32, #tpu.memory_space<vmem>>, vector<16x16xf32>,
    return
  }
  func.func @transform_0(%arg0: i32) -> (i32, i32) {
    %c0_i32 = arith.constant 0 : i32
    %c0_i32_0 = arith.constant 0 : i32
    return %arg0, %c0_i32 : i32, i32
  }
  func.func @transform_1(%arg0: i32) -> (i32, i32) {
    %c0_i32 = arith.constant 0 : i32
    %c0_i32_0 = arith.constant 0 : i32
    %c0_i32_1 = arith.constant 0 : i32
    return %c0_i32, %c0_i32_0 : i32, i32
  }
  func.func @transform_2(%arg0: i32) -> (i32, i32) {
    %c0_i32 = arith.constant 0 : i32
    %c0_i32_0 = arith.constant 0 : i32
    %c0_i32_1 = arith.constant 0 : i32
    return %c0_i32, %c0_i32_0 : i32, i32
  }
  func.func @transform_3(%arg0: i32) -> (i32, i32) {
    %c0_i32 = arith.constant 0 : i32
    %c0_i32_0 = arith.constant 0 : i32
    %c0_i32_1 = arith.constant 0 : i32
    return %c0_i32, %c0_i32_0 : i32, i32
  }
  func.func @transform_4(%arg0: i32) -> (i32, i32) {
    %c0_i32 = arith.constant 0 : i32
    %c0_i32_0 = arith.constant 0 : i32
    %c0_i32_1 = arith.constant 0 : i32
    return %c0_i32, %c0_i32_0 : i32, i32
  }
  func.func @transform_5(%arg0: i32) -> (i32, i32) {
    %c0_i32 = arith.constant 0 : i32
    %c0_i32_0 = arith.constant 0 : i32
    return %arg0, %c0_i32 : i32, i32
  }
}

</mosaic_0001>

<llo_original>
// kernel: custom_mlp.1
$region0: #{custom_mlp.1}
  #allocation0 [shape = 'u32[]', space=smem, size = 0x4, offset = 0x4, fixed_abs, tag = 'smem constant byte address 0x4 - core index']
  #allocation1 [shape = 'u32[72,128]{1,0:T(1,128)}', space=vmem, size = 0x9000, scoped, tag = 'internal scratch']
  %s0 = inlined_call_operand.vmem [shape: f32[16,256], index: 0, kind: input, shape index: {}]
  %s1 = inlined_call_operand.vmem [shape: bf16[256,256], index: 1, kind: input, shape index: {}]
  %s2 = inlined_call_operand.vmem [shape: f32[1,256], index: 2, kind: input, shape index: {}]
  %s3 = inlined_call_operand.vmem [shape: bf16[256,16], index: 3, kind: input, shape index: {}]
  %s4 = inlined_call_operand.vmem [shape: f32[1,16], index: 4, kind: input, shape index: {}]
  %s5 = inlined_call_operand.vmem [shape: f32[16,16], index: 5, kind: output, shape index: {}]
  %s6 = sld [smem:[#allocation0]]
  $region30: #{custom_mlp.1} parent=0
    _
  %s8 = ssub.s32 1, %s6
  %s9 = scalar_select 0, %s8, %s6
  // Predicated region
  $region2: #{custom_mlp.1} parent=0 // pred_check
    _
  $region3: #{custom_mlp.1} parent=0 // pred_check_branch
    %11 = sbr.rel (0) target = $region5
  $region4: #{custom_mlp.1} parent=0 // pred_region
    _
  $region5: #{custom_mlp.1} parent=0 // pred_fallthru
    _
  // Predicated region
  $region6: #{custom_mlp.1} parent=0 // pred_check
    _
  $region7: #{custom_mlp.1} parent=0 // pred_check_branch
    %13 = sbr.rel (0) target = $region9
  $region8: #{custom_mlp.1} parent=0 // pred_region
    _
  $region9: #{custom_mlp.1} parent=0 // pred_fallthru
    _
  // Predicated region
  $region10: #{custom_mlp.1} parent=0 // pred_check
    _
  $region11: #{custom_mlp.1} parent=0 // pred_check_branch
    %15 = sbr.rel (0) target = $region13
  $region12: #{custom_mlp.1} parent=0 // pred_region
    _
  $region13: #{custom_mlp.1} parent=0 // pred_fallthru
    _
  // Predicated region
  $region14: #{custom_mlp.1} parent=0 // pred_check
    _
  $region15: #{custom_mlp.1} parent=0 // pred_check_branch
    %17 = sbr.rel (0) target = $region17
  $region16: #{custom_mlp.1} parent=0 // pred_region
    _
  $region17: #{custom_mlp.1} parent=0 // pred_fallthru
    _
  // Predicated region
  $region18: #{custom_mlp.1} parent=0 // pred_check
    _
  $region19: #{custom_mlp.1} parent=0 // pred_check_branch
    %19 = sbr.rel (0) target = $region21
  $region20: #{custom_mlp.1} parent=0 // pred_region
    _
  $region21: #{custom_mlp.1} parent=0 // pred_fallthru
    _
  %v20 = vld [vmem:[%s0] sm:$0xff]
  %v21 = vld [vmem:[%s0 + $0x8] sm:$0xff]
  %v22 = vld [vmem:[%s0 + $0x10] sm:$0xff]
  %v23 = vld [vmem:[%s0 + $0x18] sm:$0xff]
  %v24 = vpack.c.bf16 %v22, %v20
  %v25 = vpack.c.bf16 %v23, %v21
  %v26 = vld [vmem:[%s1] sm:$0xff]
  %v27 = vld [vmem:[%s1 + $0x8] sm:$0xff]
  %v28 = vld [vmem:[%s1 + $0x10] sm:$0xff]
  %v29 = vld [vmem:[%s1 + $0x18] sm:$0xff]
  %v30 = vld [vmem:[%s1 + $0x20] sm:$0xff]
  %v31 = vld [vmem:[%s1 + $0x28] sm:$0xff]
  %v32 = vld [vmem:[%s1 + $0x30] sm:$0xff]
  %v33 = vld [vmem:[%s1 + $0x38] sm:$0xff]
  %v34 = vld [vmem:[%s1 + $0x40] sm:$0xff]
  %v35 = vld [vmem:[%s1 + $0x48] sm:$0xff]
  %v36 = vld [vmem:[%s1 + $0x50] sm:$0xff]
  %v37 = vld [vmem:[%s1 + $0x58] sm:$0xff]
  %v38 = vld [vmem:[%s1 + $0x60] sm:$0xff]
  %v39 = vld [vmem:[%s1 + $0x68] sm:$0xff]
  %v40 = vld [vmem:[%s1 + $0x70] sm:$0xff]
  %v41 = vld [vmem:[%s1 + $0x78] sm:$0xff]
  %v42 = vld [vmem:[%s1 + $0x80] sm:$0xff]
  %v43 = vld [vmem:[%s1 + $0x88] sm:$0xff]
  %v44 = vld [vmem:[%s1 + $0x90] sm:$0xff]
  %v45 = vld [vmem:[%s1 + $0x98] sm:$0xff]
  %v46 = vld [vmem:[%s1 + $0xa0] sm:$0xff]
  %v47 = vld [vmem:[%s1 + $0xa8] sm:$0xff]
  %v48 = vld [vmem:[%s1 + $0xb0] sm:$0xff]
  %v49 = vld [vmem:[%s1 + $0xb8] sm:$0xff]
  %v50 = vld [vmem:[%s1 + $0xc0] sm:$0xff]
  %v51 = vld [vmem:[%s1 + $0xc8] sm:$0xff]
  %v52 = vld [vmem:[%s1 + $0xd0] sm:$0xff]
  %v53 = vld [vmem:[%s1 + $0xd8] sm:$0xff]
  %v54 = vld [vmem:[%s1 + $0xe0] sm:$0xff]
  %v55 = vld [vmem:[%s1 + $0xe8] sm:$0xff]
  %v56 = vld [vmem:[%s1 + $0xf0] sm:$0xff]
  %v57 = vld [vmem:[%s1 + $0xf8] sm:$0xff]
  %v58 = vld [vmem:[%s2] sm:$0x3]
  %v60 = vperm.slane %v58, 0
  %v61 = vperm.slane %v58, 1
  %v96 = vunpack.c.l.b16 %v26
  %v97 = vunpack.c.h.b16 %v26
  %v98 = vunpack.c.l.b16 %v27
  %v99 = vunpack.c.h.b16 %v27
  %v100 = vunpack.c.l.b16 %v28
  %v101 = vunpack.c.h.b16 %v28
  %v102 = vunpack.c.l.b16 %v29
  %v103 = vunpack.c.h.b16 %v29
  %v104 = vunpack.c.l.b16 %v30
  %v105 = vunpack.c.h.b16 %v30
  %v106 = vunpack.c.l.b16 %v31
  %v107 = vunpack.c.h.b16 %v31
  %v108 = vunpack.c.l.b16 %v32
  %v109 = vunpack.c.h.b16 %v32
  %v110 = vunpack.c.l.b16 %v33
  %v111 = vunpack.c.h.b16 %v33
  %v112 = vunpack.c.l.b16 %v34
  %v113 = vunpack.c.h.b16 %v34
  %v114 = vunpack.c.l.b16 %v35
  %v115 = vunpack.c.h.b16 %v35
  %v116 = vunpack.c.l.b16 %v36
  %v117 = vunpack.c.h.b16 %v36
  %v118 = vunpack.c.l.b16 %v37
  %v119 = vunpack.c.h.b16 %v37
  %v120 = vunpack.c.l.b16 %v38
  %v121 = vunpack.c.h.b16 %v38
  %v122 = vunpack.c.l.b16 %v39
  %v123 = vunpack.c.h.b16 %v39
  %v124 = vunpack.c.l.b16 %v40
  %v125 = vunpack.c.h.b16 %v40
  %v126 = vunpack.c.l.b16 %v41
  %v127 = vunpack.c.h.b16 %v41
  %v128 = vunpack.c.l.b16 %v42
  %v129 = vunpack.c.h.b16 %v42
  %v130 = vunpack.c.l.b16 %v43
  %v131 = vunpack.c.h.b16 %v43
  %v132 = vunpack.c.l.b16 %v44
  %v133 = vunpack.c.h.b16 %v44
  %v134 = vunpack.c.l.b16 %v45
  %v135 = vunpack.c.h.b16 %v45
  %v136 = vunpack.c.l.b16 %v46
  %v137 = vunpack.c.h.b16 %v46
  %v138 = vunpack.c.l.b16 %v47
  %v139 = vunpack.c.h.b16 %v47
  %v140 = vunpack.c.l.b16 %v48
  %v141 = vunpack.c.h.b16 %v48
  %v142 = vunpack.c.l.b16 %v49
  %v143 = vunpack.c.h.b16 %v49
  %v144 = vunpack.c.l.b16 %v50
  %v145 = vunpack.c.h.b16 %v50
  %v146 = vunpack.c.l.b16 %v51
  %v147 = vunpack.c.h.b16 %v51
  %v148 = vunpack.c.l.b16 %v52
  %v149 = vunpack.c.h.b16 %v52
  %v150 = vunpack.c.l.b16 %v53
  %v151 = vunpack.c.h.b16 %v53
  %v152 = vunpack.c.l.b16 %v54
  %v153 = vunpack.c.h.b16 %v54
  %v154 = vunpack.c.l.b16 %v55
  %v155 = vunpack.c.h.b16 %v55
  %v156 = vunpack.c.l.b16 %v56
  %v157 = vunpack.c.h.b16 %v56
  %v158 = vunpack.c.l.b16 %v57
  %v159 = vunpack.c.h.b16 %v57
  %v160 = vpack.c.b16 %v98, %v96
  %v161 = vpack.c.b16 %v99, %v97
  %v162 = vpack.c.b16 %v102, %v100
  %v163 = vpack.c.b16 %v103, %v101
  %v164 = vpack.c.b16 %v106, %v104
  %v165 = vpack.c.b16 %v107, %v105
  %v166 = vpack.c.b16 %v110, %v108
  %v167 = vpack.c.b16 %v111, %v109
  %v168 = vpack.c.b16 %v114, %v112
  %v169 = vpack.c.b16 %v115, %v113
  %v170 = vpack.c.b16 %v118, %v116
  %v171 = vpack.c.b16 %v119, %v117
  %v172 = vpack.c.b16 %v122, %v120
  %v173 = vpack.c.b16 %v123, %v121
  %v174 = vpack.c.b16 %v126, %v124
  %v175 = vpack.c.b16 %v127, %v125
  %v176 = vpack.c.b16 %v130, %v128
  %v177 = vpack.c.b16 %v131, %v129
  %v178 = vpack.c.b16 %v134, %v132
  %v179 = vpack.c.b16 %v135, %v133
  %v180 = vpack.c.b16 %v138, %v136
  %v181 = vpack.c.b16 %v139, %v137
  %v182 = vpack.c.b16 %v142, %v140
  %v183 = vpack.c.b16 %v143, %v141
  %v184 = vpack.c.b16 %v146, %v144
  %v185 = vpack.c.b16 %v147, %v145
  %v186 = vpack.c.b16 %v150, %v148
  %v187 = vpack.c.b16 %v151, %v149
  %v188 = vpack.c.b16 %v154, %v152
  %v189 = vpack.c.b16 %v155, %v153
  %v190 = vpack.c.b16 %v158, %v156
  %v191 = vpack.c.b16 %v159, %v157
  %224 = vmatpush.bf16.msra.mxu0 %v174
  %225 = vmatpush.bf16.msra.mxu0 %v172
  %226 = vmatpush.bf16.msra.mxu0 %v170
  %227 = vmatpush.bf16.msra.mxu0 %v168
  %228 = vmatpush.bf16.msra.mxu0 %v166
  %229 = vmatpush.bf16.msra.mxu0 %v164
  %230 = vmatpush.bf16.msra.mxu0 %v162
  %231 = vmatpush.bf16.msra.mxu0 %v160
  %232 = vmatmul.bf16.gmra.mxu0 %v24
  %v233 = vpop.f32.mrf.mxu0
  %v234 = vadd.f32 %v60, %v233
  %v235 = vpop.f32.mrf.mxu0
  %v236 = vadd.f32 %v60, %v235
  %237 = vdwg.mxu0
  %238 = vmatpush.bf16.msra.mxu0 %v190
  %239 = vmatpush.bf16.msra.mxu0 %v188
  %240 = vmatpush.bf16.msra.mxu0 %v186
  %241 = vmatpush.bf16.msra.mxu0 %v184
  %242 = vmatpush.bf16.msra.mxu0 %v182
  %243 = vmatpush.bf16.msra.mxu0 %v180
  %244 = vmatpush.bf16.msra.mxu0 %v178
  %245 = vmatpush.bf16.msra.mxu0 %v176
  %246 = vmatmul.bf16.gmra.mxu0 %v25
  %v247 = vpop.f32.mrf.mxu0
  %v248 = vadd.f32 %v234, %v247
  %v249 = vpop.f32.mrf.mxu0
  %v250 = vadd.f32 %v236, %v249
  %251 = vdwg.mxu0
  %252 = vmatpush.bf16.msra.mxu0 %v175
  %253 = vmatpush.bf16.msra.mxu0 %v173
  %254 = vmatpush.bf16.msra.mxu0 %v171
  %255 = vmatpush.bf16.msra.mxu0 %v169
  %256 = vmatpush.bf16.msra.mxu0 %v167
  %257 = vmatpush.bf16.msra.mxu0 %v165
  %258 = vmatpush.bf16.msra.mxu0 %v163
  %259 = vmatpush.bf16.msra.mxu0 %v161
  %260 = vmatmul.bf16.gmra.mxu0 %v24
  %v261 = vpop.f32.mrf.mxu0
  %v262 = vadd.f32 %v61, %v261
  %v263 = vpop.f32.mrf.mxu0
  %v264 = vadd.f32 %v61, %v263
  %265 = vdwg.mxu0
  %266 = vmatpush.bf16.msra.mxu0 %v191
  %267 = vmatpush.bf16.msra.mxu0 %v189
  %268 = vmatpush.bf16.msra.mxu0 %v187
  %269 = vmatpush.bf16.msra.mxu0 %v185
  %270 = vmatpush.bf16.msra.mxu0 %v183
  %271 = vmatpush.bf16.msra.mxu0 %v181
  %272 = vmatpush.bf16.msra.mxu0 %v179
  %273 = vmatpush.bf16.msra.mxu0 %v177
  %274 = vmatmul.bf16.gmra.mxu0 %v25
  %v275 = vpop.f32.mrf.mxu0
  %v276 = vadd.f32 %v262, %v275
  %v277 = vpop.f32.mrf.mxu0
  %v278 = vadd.f32 %v264, %v277
  %279 = vdwg.mxu0
  %v280 = vmax.f32 %v248, 0.0
  %v281 = vmax.f32 %v276, 0.0
  %v282 = vmax.f32 %v250, 0.0
  %v283 = vmax.f32 %v278, 0.0
  %v284 = vpack.c.bf16 %v282, %v280
  %v285 = vpack.c.bf16 %v283, %v281
  %v286 = vld [vmem:[%s3] sm:$0xf]
  %v287 = vld [vmem:[%s3 + $0x4] sm:$0xf]
  %v288 = vld [vmem:[%s3 + $0x8] sm:$0xf]
  %v289 = vld [vmem:[%s3 + $0xc] sm:$0xf]
  %v290 = vld [vmem:[%s3 + $0x10] sm:$0xf]
  %v291 = vld [vmem:[%s3 + $0x14] sm:$0xf]
  %v292 = vld [vmem:[%s3 + $0x18] sm:$0xf]
  %v293 = vld [vmem:[%s3 + $0x1c] sm:$0xf]
  %v294 = vld [vmem:[%s3 + $0x20] sm:$0xf]
  %v295 = vld [vmem:[%s3 + $0x24] sm:$0xf]
  %v296 = vld [vmem:[%s3 + $0x28] sm:$0xf]
  %v297 = vld [vmem:[%s3 + $0x2c] sm:$0xf]
  %v298 = vld [vmem:[%s3 + $0x30] sm:$0xf]
  %v299 = vld [vmem:[%s3 + $0x34] sm:$0xf]
  %v300 = vld [vmem:[%s3 + $0x38] sm:$0xf]
  %v301 = vld [vmem:[%s3 + $0x3c] sm:$0xf]
  %v302 = vld [vmem:[%s3 + $0x40] sm:$0xf]
  %v303 = vld [vmem:[%s3 + $0x44] sm:$0xf]
  %v304 = vld [vmem:[%s3 + $0x48] sm:$0xf]
  %v305 = vld [vmem:[%s3 + $0x4c] sm:$0xf]
  %v306 = vld [vmem:[%s3 + $0x50] sm:$0xf]
  %v307 = vld [vmem:[%s3 + $0x54] sm:$0xf]
  %v308 = vld [vmem:[%s3 + $0x58] sm:$0xf]
  %v309 = vld [vmem:[%s3 + $0x5c] sm:$0xf]
  %v310 = vld [vmem:[%s3 + $0x60] sm:$0xf]
  %v311 = vld [vmem:[%s3 + $0x64] sm:$0xf]
  %v312 = vld [vmem:[%s3 + $0x68] sm:$0xf]
  %v313 = vld [vmem:[%s3 + $0x6c] sm:$0xf]
  %v314 = vld [vmem:[%s3 + $0x70] sm:$0xf]
  %v315 = vld [vmem:[%s3 + $0x74] sm:$0xf]
  %v316 = vld [vmem:[%s3 + $0x78] sm:$0xf]
  %v317 = vld [vmem:[%s3 + $0x7c] sm:$0xf]
  %v318 = vld [vmem:[%s4] sm:$0x1]
  %v320 = vperm.slane %v318, 0
  %v354 = vunpack.c.l.b16 %v286
  %v355 = vunpack.c.l.b16 %v287
  %v356 = vunpack.c.l.b16 %v288
  %v357 = vunpack.c.l.b16 %v289
  %v358 = vunpack.c.l.b16 %v290
  %v359 = vunpack.c.l.b16 %v291
  %v360 = vunpack.c.l.b16 %v292
  %v361 = vunpack.c.l.b16 %v293
  %v362 = vunpack.c.l.b16 %v294
  %v363 = vunpack.c.l.b16 %v295
  %v364 = vunpack.c.l.b16 %v296
  %v365 = vunpack.c.l.b16 %v297
  %v366 = vunpack.c.l.b16 %v298
  %v367 = vunpack.c.l.b16 %v299
  %v368 = vunpack.c.l.b16 %v300
  %v369 = vunpack.c.l.b16 %v301
  %v370 = vunpack.c.l.b16 %v302
  %v371 = vunpack.c.l.b16 %v303
  %v372 = vunpack.c.l.b16 %v304
  %v373 = vunpack.c.l.b16 %v305
  %v374 = vunpack.c.l.b16 %v306
  %v375 = vunpack.c.l.b16 %v307
  %v376 = vunpack.c.l.b16 %v308
  %v377 = vunpack.c.l.b16 %v309
  %v378 = vunpack.c.l.b16 %v310
  %v379 = vunpack.c.l.b16 %v311
  %v380 = vunpack.c.l.b16 %v312
  %v381 = vunpack.c.l.b16 %v313
  %v382 = vunpack.c.l.b16 %v314
  %v383 = vunpack.c.l.b16 %v315
  %v384 = vunpack.c.l.b16 %v316
  %v385 = vunpack.c.l.b16 %v317
  %v386 = vpack.c.b16 %v355, %v354
  %v387 = vpack.c.b16 %v357, %v356
  %v388 = vpack.c.b16 %v359, %v358
  %v389 = vpack.c.b16 %v361, %v360
  %v390 = vpack.c.b16 %v363, %v362
  %v391 = vpack.c.b16 %v365, %v364
  %v392 = vpack.c.b16 %v367, %v366
  %v393 = vpack.c.b16 %v369, %v368
  %v394 = vpack.c.b16 %v371, %v370
  %v395 = vpack.c.b16 %v373, %v372
  %v396 = vpack.c.b16 %v375, %v374
  %v397 = vpack.c.b16 %v377, %v376
  %v398 = vpack.c.b16 %v379, %v378
  %v399 = vpack.c.b16 %v381, %v380
  %v400 = vpack.c.b16 %v383, %v382
  %v401 = vpack.c.b16 %v385, %v384
  %418 = vmatpush.bf16.msra.mxu0 %v393
  %419 = vmatpush.bf16.msra.mxu0 %v392
  %420 = vmatpush.bf16.msra.mxu0 %v391
  %421 = vmatpush.bf16.msra.mxu0 %v390
  %422 = vmatpush.bf16.msra.mxu0 %v389
  %423 = vmatpush.bf16.msra.mxu0 %v388
  %424 = vmatpush.bf16.msra.mxu0 %v387
  %425 = vmatpush.bf16.msra.mxu0 %v386
  %426 = vmatmul.bf16.gmra.mxu0 %v284
  %v427 = vpop.f32.mrf.mxu0
  %v428 = vadd.f32 %v320, %v427
  %v429 = vpop.f32.mrf.mxu0
  %v430 = vadd.f32 %v320, %v429
  %431 = vdwg.mxu0
  %432 = vmatpush.bf16.msra.mxu0 %v401
  %433 = vmatpush.bf16.msra.mxu0 %v400
  %434 = vmatpush.bf16.msra.mxu0 %v399
  %435 = vmatpush.bf16.msra.mxu0 %v398
  %436 = vmatpush.bf16.msra.mxu0 %v397
  %437 = vmatpush.bf16.msra.mxu0 %v396
  %438 = vmatpush.bf16.msra.mxu0 %v395
  %439 = vmatpush.bf16.msra.mxu0 %v394
  %440 = vmatmul.bf16.gmra.mxu0 %v285
  %v441 = vpop.f32.mrf.mxu0
  %v442 = vadd.f32 %v428, %v441
  %v443 = vpop.f32.mrf.mxu0
  %v444 = vadd.f32 %v430, %v443
  %445 = vdwg.mxu0
  %vm446 = vcmask 130048
  %447 = vst.msk [vmem:[%s5] sm:$0xff] %vm446, %v442
  %448 = vst.msk [vmem:[%s5 + $0x8] sm:$0xff] %vm446, %v444
  // Predicated region
  $region22: #{custom_mlp.1} parent=0 // pred_check
    _
  $region23: #{custom_mlp.1} parent=0 // pred_check_branch
    %450 = sbr.rel (0) target = $region25
  $region24: #{custom_mlp.1} parent=0 // pred_region
    _
  $region25: #{custom_mlp.1} parent=0 // pred_fallthru
    _
  // Predicated region
  $region26: #{custom_mlp.1} parent=0 // pred_check
    _
  $region27: #{custom_mlp.1} parent=0 // pred_check_branch
    %452 = sbr.rel (0) target = $region29
  $region28: #{custom_mlp.1} parent=0 // pred_region
    _
  $region29: #{custom_mlp.1} parent=0 // pred_fallthru
    _

</llo_original>
